<compile_context>
chip_gen: v5e
topology: v5e:2x2
jax: 0.10.0
libtpu: 0.0.40
codegen_flags: <defaults>
</compile_context>

<pallas_src>
import functools

import jax
import jax.numpy as jnp
from jax.experimental import pallas as pl
from jax.experimental.pallas import tpu as pltpu


def _round_up(x, m):
    return (x + m - 1) // m * m


def critic_kernel(state_ref, action_ref,
                  w1_ref, b1_ref,
                  w2s_ref, w2a_ref, b2_ref,
                  w3_ref, b3_ref,
                  out_ref):
    op_dtype = w1_ref.dtype   # matmul operand dtype (f32 or bf16)

    # --- fcs1 + ReLU (bias add / ReLU / accumulation stay f32: v5e VPU has no bf16) ---
    xs = jnp.dot(state_ref[...].astype(op_dtype), w1_ref[...],
                 preferred_element_type=jnp.float32) + b1_ref[...]
    xs = jnp.maximum(xs, 0.0)

    # --- fcs2 on concat([xs, action]) + ReLU (concat fused as two matmuls) ---
    h = (jnp.dot(xs.astype(op_dtype), w2s_ref[...],
                 preferred_element_type=jnp.float32)
         + jnp.dot(action_ref[...].astype(op_dtype), w2a_ref[...],
                   preferred_element_type=jnp.float32)
         + b2_ref[...])
    h = jnp.maximum(h, 0.0)

    # --- fcs3: output width 1 -> VPU multiply + XLU lane reduction (no MXU pass) ---
    q = jnp.sum(h * w3_ref[...], axis=-1, keepdims=True) + b3_ref[0, 0]
    out_ref[...] = q.astype(out_ref.dtype)


def prepare_critic_params(params, operand_dtype=jnp.float32):
    """One-time layout prep: transpose to [in, out], split fcs2 weight,
    reshape biases to rows. Matmul weights may be cast (e.g. bf16) here;
    biases and the final w3 row stay f32 (elementwise path)."""
    w1, b1, w2, b2, w3, b3 = (params["w1"], params["b1"], params["w2"],
                              params["b2"], params["w3"], params["b3"])
    h0 = w1.shape[0]
    w2_t = w2.T                                        # [H0+A, H1]
    return {
        "w1_t": w1.T.astype(operand_dtype),            # [S, H0]
        "w2s_t": w2_t[:h0, :].astype(operand_dtype),   # [H0, H1]
        "w2a_t": w2_t[h0:, :].astype(operand_dtype),   # [A, H1]
        "w3_row": w3.reshape(1, -1).astype(jnp.float32),   # [1, H1]
        "b1": b1.reshape(1, -1).astype(jnp.float32),
        "b2": b2.reshape(1, -1).astype(jnp.float32),
        "b3": b3.reshape(1, 1).astype(jnp.float32),    # scalar -> SMEM
    }


def _choose_row_tile(B, block_rows, sublane):
    """Pick the batch tile: big (amortize the ~0.35us/step overhead), but split
    medium batches into exactly two balanced tiles so v7x megacore gets work."""
    b_rounded = _round_up(B, sublane)
    min_split = 256          # don't split if each half would be overhead-bound
    if b_rounded > 2 * block_rows:
        return block_rows                               # many full-size tiles
    if b_rounded >= 2 * min_split:
        return _round_up((b_rounded + 1) // 2, sublane)  # exactly 2 balanced tiles
    return b_rounded                                    # single tile (small batch)


@functools.partial(jax.jit, static_argnames=("block_rows",))
def critic_forward(state, action, prep, block_rows=4096):
    """state: [B, S], action: [B, A] -> Q: [B, 1] (f32)."""
    B, S = state.shape
    A = action.shape[1]
    H0 = prep["w1_t"].shape[1]
    H1 = prep["w2s_t"].shape[1]

    # Sublane granularity for the row tile: 8 for f32 inputs, 16 for bf16/f16.
    min_itemsize = min(jnp.dtype(state.dtype).itemsize,
                       jnp.dtype(action.dtype).itemsize, 4)
    sublane = {4: 8, 2: 16, 1: 32}[min_itemsize]

    tb = _choose_row_tile(B, block_rows, sublane)
    grid = (pl.cdiv(B, tb),)     # ragged tail handled by Pallas edge blocks

    def batch_spec(feat):
        return pl.BlockSpec((tb, feat), lambda i: (i, 0))

    def resident_spec(arr):
        return pl.BlockSpec(arr.shape, lambda i: (0, 0))

    in_specs = [
        batch_spec(S),                    # state tile (streamed / double-buffered)
        batch_spec(A),                    # action tile
        resident_spec(prep["w1_t"]),      # weights stay VMEM-resident
        resident_spec(prep["b1"]),
        resident_spec(prep["w2s_t"]),
        resident_spec(prep["w2a_t"]),
        resident_spec(prep["b2"]),
        resident_spec(prep["w3_row"]),
        pl.BlockSpec(memory_space=pltpu.MemorySpace.SMEM),   # b3 scalar in SMEM
    ]
    out_spec = pl.BlockSpec((tb, 1), lambda i: (i, 0))

    w_itemsize = jnp.dtype(prep["w1_t"].dtype).itemsize
    flops = 2 * B * (S * H0 + (H0 + A) * H1 + H1)
    bytes_accessed = (
        B * S * jnp.dtype(state.dtype).itemsize            # state stream
        + B * A * jnp.dtype(action.dtype).itemsize         # action stream
        + (S * H0 + (H0 + A) * H1) * w_itemsize             # matmul weights
        + (H0 + H1 + H1 + 1) * 4                            # biases + w3 row
        + B * 4)                                             # output
    cost = pl.CostEstimate(flops=flops, transcendentals=0,
                           bytes_accessed=bytes_accessed)

    return pl.pallas_call(
        critic_kernel,
        out_shape=jax.ShapeDtypeStruct((B, 1), jnp.float32),
        grid=grid,
        in_specs=in_specs,
        out_specs=out_spec,
        compiler_params=pltpu.CompilerParams(
            dimension_semantics=("parallel",)),
        cost_estimate=cost,
    )(state, action,
      prep["w1_t"], prep["b1"],
      prep["w2s_t"], prep["w2a_t"], prep["b2"],
      prep["w3_row"], prep["b3"])


def init_critic_params(key, state_size, action_size, hidden_layers):
    """Deterministic init mirroring Critic.reset_parameters (use_reset=True).
    NOTE: hidden_init in the reference repo uses fan_in = weight.size(0) =
    out_features; this is reproduced intentionally for parity — do not 'fix'."""
    h0, h1 = hidden_layers
    k = jax.random.split(key, 6)

    lim1 = 1.0 / jnp.sqrt(jnp.float32(h0))
    lim2 = 1.0 / jnp.sqrt(jnp.float32(h1))

    w1 = jax.random.uniform(k[0], (h0, state_size), jnp.float32, -lim1, lim1)
    b1 = jax.random.uniform(k[1], (h0,), jnp.float32, -lim1, lim1)
    w2 = jax.random.uniform(k[2], (h1, h0 + action_size), jnp.float32, -lim2, lim2)
    b2 = jax.random.uniform(k[3], (h1,), jnp.float32, -lim2, lim2)
    w3 = jax.random.uniform(k[4], (1, h1), jnp.float32, -0.003, 0.003)
    b3 = jax.random.uniform(k[5], (1,), jnp.float32, -0.003, 0.003)
    return {"w1": w1, "b1": b1, "w2": w2, "b2": b2, "w3": w3, "b3": b3}


def critic_forward_ref(state, action, params):
    """Pure-JAX reference matching the PyTorch forward (use_bn=False)."""
    xs = jax.nn.relu(state @ params["w1"].T + params["b1"])
    x = jnp.concatenate([xs, action], axis=1)
    x = jax.nn.relu(x @ params["w2"].T + params["b2"])
    return x @ params["w3"].T + params["b3"]


if __name__ == "__main__":
    # Small shapes consistent with the module's forward.
    batch = 8
    state_size = 16
    action_size = 4
    hidden_layers = [32, 32]

    key = jax.random.PRNGKey(0)
    kp, ks, ka, ks2, ka2 = jax.random.split(key, 5)

    params = init_critic_params(kp, state_size, action_size, hidden_layers)
    prep = prepare_critic_params(params)   # one-time transpose/split, not per call

    state = jax.random.normal(ks, (batch, state_size), jnp.float32)
    action = jax.random.normal(ka, (batch, action_size), jnp.float32)

    q = critic_forward(state, action, prep)
    q = jax.block_until_ready(q)
    q_ref = critic_forward_ref(state, action, params)
    assert q.shape == (batch, 1)
    assert jnp.allclose(q, q_ref, atol=1e-4, rtol=1e-5), "mismatch vs reference (small)"

    # Exercise the multi-tile grid path + Pallas ragged-edge block (B % tb != 0,
    # no wrapper-side padding / extra HBM passes).
    big_b = 1037
    state_b = jax.random.normal(ks2, (big_b, state_size), jnp.float32)
    action_b = jax.random.normal(ka2, (big_b, action_size), jnp.float32)
    q_b = jax.block_until_ready(critic_forward(state_b, action_b, prep))
    q_b_ref = critic_forward_ref(state_b, action_b, params)
    assert q_b.shape == (big_b, 1)
    assert jnp.allclose(q_b, q_b_ref, atol=1e-4, rtol=1e-5), "mismatch vs reference (tiled)"

    # TODO(synk): use_bn=True path (BatchNorm1d with batch statistics) not
    # implemented; this kernel covers the use_bn=False configuration.
    print("KERNEL_OK")
</pallas_src>

<mosaic_0001>
module attributes {stable_mosaic.version = 11 : i64} {
  func.func @critic_kernel(%arg0: i32, %arg1: memref<8x16xf32, #tpu.memory_space<vmem>>, %arg2: memref<8x4xf32, #tpu.memory_space<vmem>>, %arg3: memref<16x32xf32, #tpu.memory_space<vmem>>, %arg4: memref<1x32xf32, #tpu.memory_space<vmem>>, %arg5: memref<32x32xf32, #tpu.memory_space<vmem>>, %arg6: memref<4x32xf32, #tpu.memory_space<vmem>>, %arg7: memref<1x32xf32, #tpu.memory_space<vmem>>, %arg8: memref<1x32xf32, #tpu.memory_space<vmem>>, %arg9: memref<1x1xf32, #tpu.memory_space<smem>>, %arg10: memref<8x1xf32, #tpu.memory_space<vmem>>) attributes {dimension_semantics = [#tpu.dimension_semantics<parallel>], iteration_bounds = array<i64: 1>, scalar_prefetch = 0 : i64, scratch_operands = 0 : i64, tpu.core_type = #tpu.core_type<tc>, window_params = [{transform_indices = @transform_0, window_bounds = array<i64: 8, 16>}, {transform_indices = @transform_1, window_bounds = array<i64: 8, 4>}, {pipeline_mode = #tpu.pipeline_mode<synchronous>, transform_indices = @transform_2, window_bounds = array<i64: 16, 32>}, {pipeline_mode = #tpu.pipeline_mode<synchronous>, transform_indices = @transform_3, window_bounds = array<i64: 1, 32>}, {pipeline_mode = #tpu.pipeline_mode<synchronous>, transform_indices = @transform_4, window_bounds = array<i64: 32, 32>}, {pipeline_mode = #tpu.pipeline_mode<synchronous>, transform_indices = @transform_5, window_bounds = array<i64: 4, 32>}, {pipeline_mode = #tpu.pipeline_mode<synchronous>, transform_indices = @transform_6, window_bounds = array<i64: 1, 32>}, {pipeline_mode = #tpu.pipeline_mode<synchronous>, transform_indices = @transform_7, window_bounds = array<i64: 1, 32>}, {transform_indices = @transform_8, window_bounds = array<i64: 1, 1>}, {transform_indices = @transform_9, window_bounds = array<i64: 8, 1>}]} {
    %c0 = arith.constant 0 : index
    %c0_0 = arith.constant 0 : index
    %0 = vector.load %arg1[%c0, %c0_0] : memref<8x16xf32, #tpu.memory_space<vmem>>, vector<8x16xf32>
    %c0_1 = arith.constant 0 : index
    %c0_2 = arith.constant 0 : index
    %1 = vector.load %arg3[%c0_1, %c0_2] : memref<16x32xf32, #tpu.memory_space<vmem>>, vector<16x32xf32>
    %cst = arith.constant dense<0.000000e+00> : vector<8x32xf32>
    %2 = tpu.matmul %0, %1, %cst {dimension_numbers = #tpu.dot_dimension_numbers<[1], [0], [0], [1], [0, 0, 1, 1], [], []>} : vector<8x16xf32>, vector<16x32xf32>, vector<8x32xf32> -> vector<8x32xf32>
    %c0_3 = arith.constant 0 : index
    %c0_4 = arith.constant 0 : index
    %3 = vector.load %arg4[%c0_3, %c0_4] : memref<1x32xf32, #tpu.memory_space<vmem>>, vector<1x32xf32>
    %4 = vector.broadcast %3 : vector<1x32xf32> to vector<8x32xf32>
    %5 = arith.addf %2, %4 : vector<8x32xf32>
    %cst_5 = arith.constant 0.000000e+00 : f32
    %6 = vector.broadcast %cst_5 : f32 to vector<8x32xf32>
    %7 = arith.maximumf %5, %6 : vector<8x32xf32>
    %c0_6 = arith.constant 0 : index
    %c0_7 = arith.constant 0 : index
    %8 = vector.load %arg5[%c0_6, %c0_7] : memref<32x32xf32, #tpu.memory_space<vmem>>, vector<32x32xf32>
    %cst_8 = arith.constant dense<0.000000e+00> : vector<8x32xf32>
    %9 = tpu.matmul %7, %8, %cst_8 {dimension_numbers = #tpu.dot_dimension_numbers<[1], [0], [0], [1], [0, 0, 1, 1], [], []>} : vector<8x32xf32>, vector<32x32xf32>, vector<8x32xf32> -> vector<8x32xf32>
    %c0_9 = arith.constant 0 : index
    %c0_10 = arith.constant 0 : index
    %10 = vector.load %arg2[%c0_9, %c0_10] : memref<8x4xf32, #tpu.memory_space<vmem>>, vector<8x4xf32>
    %c0_11 = arith.constant 0 : index
    %c0_12 = arith.constant 0 : index
    %11 = vector.load %arg6[%c0_11, %c0_12] : memref<4x32xf32, #tpu.memory_space<vmem>>, vector<4x32xf32>
    %cst_13 = arith.constant dense<0.000000e+00> : vector<8x32xf32>
    %12 = tpu.matmul %10, %11, %cst_13 {dimension_numbers = #tpu.dot_dimension_numbers<[1], [0], [0], [1], [0, 0, 1, 1], [], []>} : vector<8x4xf32>, vector<4x32xf32>, vector<8x32xf32> -> vector<8x32xf32>
    %13 = arith.addf %9, %12 : vector<8x32xf32>
    %c0_14 = arith.constant 0 : index
    %c0_15 = arith.constant 0 : index
    %14 = vector.load %arg7[%c0_14, %c0_15] : memref<1x32xf32, #tpu.memory_space<vmem>>, vector<1x32xf32>
    %15 = vector.broadcast %14 : vector<1x32xf32> to vector<8x32xf32>
    %16 = arith.addf %13, %15 : vector<8x32xf32>
    %cst_16 = arith.constant 0.000000e+00 : f32
    %17 = vector.broadcast %cst_16 : f32 to vector<8x32xf32>
    %18 = arith.maximumf %16, %17 : vector<8x32xf32>
    %c0_17 = arith.constant 0 : index
    %c0_18 = arith.constant 0 : index
    %19 = vector.load %arg8[%c0_17, %c0_18] : memref<1x32xf32, #tpu.memory_space<vmem>>, vector<1x32xf32>
    %20 = vector.broadcast %19 : vector<1x32xf32> to vector<8x32xf32>
    %21 = arith.mulf %18, %20 : vector<8x32xf32>
    %cst_19 = arith.constant dense<0.000000e+00> : vector<8xf32>
    %22 = vector.multi_reduction <add>, %21, %cst_19 [1] : vector<8x32xf32> to vector<8xf32>
    %23 = vector.shape_cast %22 : vector<8xf32> to vector<8x1xf32>
    %c0_20 = arith.constant 0 : index
    %c0_21 = arith.constant 0 : index
    %24 = memref.load %arg9[%c0_20, %c0_21] : memref<1x1xf32, #tpu.memory_space<smem>>
    %25 = vector.broadcast %24 : f32 to vector<8x1xf32>
    %26 = arith.addf %23, %25 : vector<8x1xf32>
    %c0_22 = arith.constant 0 : index
    %c0_23 = arith.constant 0 : index
    %27 = vector.load %arg10[%c0_22, %c0_23] : memref<8x1xf32, #tpu.memory_space<vmem>>, vector<8x1xf32>
    tpu.vector_store %arg10[%c0_22, %c0_23], %26 {strides = array<i32>} : memref<8x1xf32, #tpu.memory_space<vmem>>, vector<8x1xf32>,
    return
  }
  func.func @transform_0(%arg0: i32) -> (i32, i32) {
    %c0_i32 = arith.constant 0 : i32
    %c0_i32_0 = arith.constant 0 : i32
    return %arg0, %c0_i32 : i32, i32
  }
  func.func @transform_1(%arg0: i32) -> (i32, i32) {
    %c0_i32 = arith.constant 0 : i32
    %c0_i32_0 = arith.constant 0 : i32
    return %arg0, %c0_i32 : i32, i32
  }
  func.func @transform_2(%arg0: i32) -> (i32, i32) {
    %c0_i32 = arith.constant 0 : i32
    %c0_i32_0 = arith.constant 0 : i32
    %c0_i32_1 = arith.constant 0 : i32
    return %c0_i32, %c0_i32_0 : i32, i32
  }
  func.func @transform_3(%arg0: i32) -> (i32, i32) {
    %c0_i32 = arith.constant 0 : i32
    %c0_i32_0 = arith.constant 0 : i32
    %c0_i32_1 = arith.constant 0 : i32
    return %c0_i32, %c0_i32_0 : i32, i32
  }
  func.func @transform_4(%arg0: i32) -> (i32, i32) {
    %c0_i32 = arith.constant 0 : i32
    %c0_i32_0 = arith.constant 0 : i32
    %c0_i32_1 = arith.constant 0 : i32
    return %c0_i32, %c0_i32_0 : i32, i32
  }
  func.func @transform_5(%arg0: i32) -> (i32, i32) {
    %c0_i32 = arith.constant 0 : i32
    %c0_i32_0 = arith.constant 0 : i32
    %c0_i32_1 = arith.constant 0 : i32
    return %c0_i32, %c0_i32_0 : i32, i32
  }
  func.func @transform_6(%arg0: i32) -> (i32, i32) {
    %c0_i32 = arith.constant 0 : i32
    %c0_i32_0 = arith.constant 0 : i32
    %c0_i32_1 = arith.constant 0 : i32
    return %c0_i32, %c0_i32_0 : i32, i32
  }
  func.func @transform_7(%arg0: i32) -> (i32, i32) {
    %c0_i32 = arith.constant 0 : i32
    %c0_i32_0 = arith.constant 0 : i32
    %c0_i32_1 = arith.constant 0 : i32
    return %c0_i32, %c0_i32_0 : i32, i32
  }
  func.func @transform_8(%arg0: i32) -> (i32, i32) {
    %c0_i32 = arith.constant 0 : i32
    %c0_i32_0 = arith.constant 0 : i32
    %c0_i32_1 = arith.constant 0 : i32
    return %c0_i32, %c0_i32_0 : i32, i32
  }
  func.func @transform_9(%arg0: i32) -> (i32, i32) {
    %c0_i32 = arith.constant 0 : i32
    %c0_i32_0 = arith.constant 0 : i32
    return %arg0, %c0_i32 : i32, i32
  }
}

</mosaic_0001>

<llo_original>
// kernel: critic_forward.1
$region0: #{critic_forward.1}
  #allocation0 [shape = 'u32[]', space=smem, size = 0x4, offset = 0x4, fixed_abs, tag = 'smem constant byte address 0x4 - core index']
  #allocation1 [shape = 'u32[72,128]{1,0:T(1,128)}', space=vmem, size = 0x9000, scoped, tag = 'internal scratch']
  #allocation2 [shape = 'f32[1,1]{1,0:T(1,128)S(6)}', space=smem, size = 0x200, scoped, tag = 'scoped memory for critic_forward.1']
  %s0 = inlined_call_operand.hbm [shape: f32[8,16], index: 0, kind: input, shape index: {}]
  %s1 = inlined_call_operand.vmem [shape: f32[8,4], index: 1, kind: input, shape index: {}]
  %s2 = inlined_call_operand.vmem [shape: f32[16,32], index: 2, kind: input, shape index: {}]
  %s3 = inlined_call_operand.vmem [shape: f32[1,32], index: 3, kind: input, shape index: {}]
  %s4 = inlined_call_operand.hbm [shape: f32[32,32], index: 4, kind: input, shape index: {}]
  %s5 = inlined_call_operand.hbm [shape: f32[4,32], index: 5, kind: input, shape index: {}]
  %s6 = inlined_call_operand.hbm [shape: f32[1,32], index: 6, kind: input, shape index: {}]
  %s7 = inlined_call_operand.vmem [shape: f32[1,32], index: 7, kind: input, shape index: {}]
  %s8 = inlined_call_operand.<no memory space> [shape: f32[1,1], index: 8, kind: input, shape index: {}]
  %s9 = inlined_call_operand.vmem [shape: f32[8,1], index: 9, kind: output, shape index: {}]
  %s10 = sld [smem:[#allocation0]]
  $region62: #{critic_forward.1} parent=0
    _
  %s12 = ssub.s32 1, %s10
  %s13 = scalar_select 0, %s12, %s10
  %14 = sst [smem:[#allocation2]] %s8
  $region1: #{critic_forward.1} parent=0
    #allocation3 [shape = 'u8[4096]{0}', space=vmem, size = 0x1000, scoped, tag = 'input window, operand 0, single buffered']
    #allocation4 [shape = 's32[1]{0}', space=sflag, size = 0x4, scoped, tag = 'scoped memory for critic_forward.1']
    #allocation5 [shape = 'u8[16384]{0}', space=vmem, size = 0x4000, scoped, tag = 'input window, operand 4, single buffered']
    #allocation6 [shape = 's32[1]{0}', space=sflag, size = 0x4, scoped, tag = 'scoped memory for critic_forward.1']
    #allocation7 [shape = 'u8[2048]{0}', space=vmem, size = 0x800, scoped, tag = 'input window, operand 5, single buffered']
    #allocation8 [shape = 'u8[512]{0}', space=vmem, size = 0x400, scoped, tag = 'input window, operand 6, single buffered']
    #allocation9 [shape = 's32[1]{0}', space=sflag, size = 0x4, scoped, tag = 'scoped memory for critic_forward.1']
    %15 = vsyncpa [#allocation4], 0
    %16 = vsyncpa [#allocation6], 0
    %17 = vsyncpa [#allocation9], 0
    // Predicated region
    $region2: #{critic_forward.1} parent=1 // pred_check
      _
    $region3: #{critic_forward.1} parent=1 // pred_check_branch
      %19 = sbr.rel (0) target = $region5
    $region4: #{critic_forward.1} parent=1 // pred_region
      %21 = vsyncadd [#allocation4], 0
      %s23 = sshll.u32 %s0, 4
      %s24 = int_to_ptr.hbm [resolvable:$true] %s23
      %s25 = sshll.u32 [#allocation3], 4
      %s26 = int_to_ptr.vmem [resolvable:$true] %s25
      %28 = dma.hbm_to_vmem [thread:$0]  %s24, 128, %s26, [#allocation4]
    $region5: #{critic_forward.1} parent=1 // pred_fallthru
      _
    // Predicated region
    $region6: #{critic_forward.1} parent=1 // pred_check
      _
    $region7: #{critic_forward.1} parent=1 // pred_check_branch
      %30 = sbr.rel (0) target = $region9
    $region8: #{critic_forward.1} parent=1 // pred_region
      _
    $region9: #{critic_forward.1} parent=1 // pred_fallthru
      _
    // Predicated region
    $region10: #{critic_forward.1} parent=1 // pred_check
      _
    $region11: #{critic_forward.1} parent=1 // pred_check_branch
      %32 = sbr.rel (0) target = $region13
    $region12: #{critic_forward.1} parent=1 // pred_region
      _
    $region13: #{critic_forward.1} parent=1 // pred_fallthru
      _
    // Predicated region
    $region14: #{critic_forward.1} parent=1 // pred_check
      _
    $region15: #{critic_forward.1} parent=1 // pred_check_branch
      %34 = sbr.rel (0) target = $region17
    $region16: #{critic_forward.1} parent=1 // pred_region
      _
    $region17: #{critic_forward.1} parent=1 // pred_fallthru
      _
    // Predicated region
    $region18: #{critic_forward.1} parent=1 // pred_check
      _
    $region19: #{critic_forward.1} parent=1 // pred_check_branch
      %36 = sbr.rel (0) target = $region21
    $region20: #{critic_forward.1} parent=1 // pred_region
      %38 = vsyncadd [#allocation6], 0
      %s39 = sshll.u32 %s4, 4
      %s40 = int_to_ptr.hbm [resolvable:$true] %s39
      %s41 = sshll.u32 [#allocation5], 4
      %s42 = int_to_ptr.vmem [resolvable:$true] %s41
      %47 = dma.hbm_to_vmem [thread:$0]  %s40, 512, %s42, [#allocation6], 128, 128, 8
    $region21: #{critic_forward.1} parent=1 // pred_fallthru
      _
    // Predicated region
    $region22: #{critic_forward.1} parent=1 // pred_check
      _
    $region23: #{critic_forward.1} parent=1 // pred_check_branch
      %49 = sbr.rel (0) target = $region25
    $region24: #{critic_forward.1} parent=1 // pred_region
      %51 = vsyncadd [#allocation6], 0
      %s53 = sshll.u32 %s5, 4
      %s54 = int_to_ptr.hbm [resolvable:$true] %s53
      %s55 = sshll.u32 [#allocation7], 4
      %s56 = int_to_ptr.vmem [resolvable:$true] %s55
      %58 = dma.hbm_to_vmem [thread:$0]  %s54, 64, %s56, [#allocation6]
    $region25: #{critic_forward.1} parent=1 // pred_fallthru
      _
    // Predicated region
    $region26: #{critic_forward.1} parent=1 // pred_check
      _
    $region27: #{critic_forward.1} parent=1 // pred_check_branch
      %60 = sbr.rel (0) target = $region29
    $region28: #{critic_forward.1} parent=1 // pred_region
      %62 = vsyncadd [#allocation9], 0
      %s64 = sshll.u32 %s6, 4
      %s65 = int_to_ptr.hbm [resolvable:$true] %s64
      %s66 = sshll.u32 [#allocation8], 4
      %s67 = int_to_ptr.vmem [resolvable:$true] %s66
      %69 = dma.hbm_to_vmem [thread:$0]  %s65, 16, %s67, [#allocation9]
    $region29: #{critic_forward.1} parent=1 // pred_fallthru
      _
    // Predicated region
    $region30: #{critic_forward.1} parent=1 // pred_check
      _
    $region31: #{critic_forward.1} parent=1 // pred_check_branch
      %71 = sbr.rel (0) target = $region33
    $region32: #{critic_forward.1} parent=1 // pred_region
      _
    $region33: #{critic_forward.1} parent=1 // pred_fallthru
      _
    // Predicated region
    $region34: #{critic_forward.1} parent=1 // pred_check
      _
    $region35: #{critic_forward.1} parent=1 // pred_check_branch
      %73 = sbr.rel (0) target = $region37
    $region36: #{critic_forward.1} parent=1 // pred_region
      _
    $region37: #{critic_forward.1} parent=1 // pred_fallthru
      _
    // Predicated region
    $region38: #{critic_forward.1} parent=1 // pred_check
      _
    $region39: #{critic_forward.1} parent=1 // pred_check_branch
      %75 = sbr.rel (0) target = $region41
    $region40: #{critic_forward.1} parent=1 // pred_region
      %77 = dma.done [#allocation4], 128
    $region41: #{critic_forward.1} parent=1 // pred_fallthru
      _
    // Predicated region
    $region42: #{critic_forward.1} parent=1 // pred_check
      _
    $region43: #{critic_forward.1} parent=1 // pred_check_branch
      %79 = sbr.rel (0) target = $region45
    $region44: #{critic_forward.1} parent=1 // pred_region
      %81 = dma.done [#allocation6], 512
    $region45: #{critic_forward.1} parent=1 // pred_fallthru
      _
    // Predicated region
    $region46: #{critic_forward.1} parent=1 // pred_check
      _
    $region47: #{critic_forward.1} parent=1 // pred_check_branch
      %83 = sbr.rel (0) target = $region49
    $region48: #{critic_forward.1} parent=1 // pred_region
      %85 = dma.done [#allocation6], 64
    $region49: #{critic_forward.1} parent=1 // pred_fallthru
      _
    // Predicated region
    $region50: #{critic_forward.1} parent=1 // pred_check
      _
    $region51: #{critic_forward.1} parent=1 // pred_check_branch
      %87 = sbr.rel (0) target = $region53
    $region52: #{critic_forward.1} parent=1 // pred_region
      %89 = dma.done [#allocation9], 16
    $region53: #{critic_forward.1} parent=1 // pred_fallthru
      _
    %v90 = vld [vmem:[#allocation3] sm:$0xff]
    %v91 = vld [vmem:[%s2] sm:$0xff]
    %v92 = vld [vmem:[%s2 + $0x8] sm:$0xff]
    %v93 = vld [vmem:[%s3] sm:$0x1]
    %v95 = vperm.slane %v93, 0
    %vm97 = vcmask 130048
    %v99 = vsel %vm97, %v90, 0
    %101 = vmatpush.msra.mxu0 0.0
    %102 = vmatpush.msra.mxu0 0.0
    %103 = vmatpush.msra.mxu0 0.0
    %104 = vmatpush.msra.mxu0 0.0
    %105 = vmatpush.msra.mxu0 0.0
    %106 = vmatpush.msra.mxu0 0.0
    %107 = vmatpush.msra.mxu0 0.0
    %108 = vmatpush.msra.mxu0 0.0
    %109 = vmatpush.msra.mxu0 0.0
    %110 = vmatpush.msra.mxu0 0.0
    %111 = vmatpush.msra.mxu0 0.0
    %112 = vmatpush.msra.mxu0 0.0
    %113 = vmatpush.msra.mxu0 0.0
    %114 = vmatpush.msra.mxu0 0.0
    %115 = vmatpush.msra.mxu0 %v92
    %116 = vmatpush.msra.mxu0 %v91
    %117 = vmatmul.f32.gmra.mxu0 %v99
    %v118 = vpop.f32.mrf.mxu0
    %v119 = vadd.f32 %v95, %v118
    %120 = vdwg.mxu0
    %v121 = vmax.f32 %v119, 0.0
    %v122 = vld [vmem:[#allocation5] sm:$0xff]
    %v123 = vld [vmem:[#allocation5 + $0x8] sm:$0xff]
    %v124 = vld [vmem:[#allocation5 + $0x10] sm:$0xff]
    %v125 = vld [vmem:[#allocation5 + $0x18] sm:$0xff]
    %v126 = vld [vmem:[%s1] sm:$0xff]
    %v127 = vld [vmem:[#allocation7] sm:$0xf]
    %vm128 = vcmask 31744
    %v130 = vsel %vm128, %v126, 0
    %vm132 = vcmask 1043456
    %v134 = vsel %vm132, %v127, 0
    %136 = vmatpush.msra.mxu0 0.0
    %137 = vmatpush.msra.mxu0 0.0
    %138 = vmatpush.msra.mxu0 0.0
    %139 = vmatpush.msra.mxu0 0.0
    %140 = vmatpush.msra.mxu0 0.0
    %141 = vmatpush.msra.mxu0 0.0
    %142 = vmatpush.msra.mxu0 0.0
    %143 = vmatpush.msra.mxu0 0.0
    %144 = vmatpush.msra.mxu0 0.0
    %145 = vmatpush.msra.mxu0 0.0
    %146 = vmatpush.msra.mxu0 0.0
    %147 = vmatpush.msra.mxu0 0.0
    %148 = vmatpush.msra.mxu0 0.0
    %149 = vmatpush.msra.mxu0 0.0
    %150 = vmatpush.msra.mxu0 0.0
    %151 = vmatpush.msra.mxu0 %v134
    %152 = vmatmul.f32.gmra.mxu0 %v130
    %v153 = vpop.f32.mrf.mxu0
    %v154 = vadd.f32 0.0, %v153
    %155 = vdwg.mxu0
    %vm156 = vcmask 261120
    %v158 = vsel %vm156, %v121, 0
    %160 = vmatpush.msra.mxu0 0.0
    %161 = vmatpush.msra.mxu0 0.0
    %162 = vmatpush.msra.mxu0 0.0
    %163 = vmatpush.msra.mxu0 0.0
    %164 = vmatpush.msra.mxu0 0.0
    %165 = vmatpush.msra.mxu0 0.0
    %166 = vmatpush.msra.mxu0 0.0
    %167 = vmatpush.msra.mxu0 0.0
    %168 = vmatpush.msra.mxu0 0.0
    %169 = vmatpush.msra.mxu0 0.0
    %170 = vmatpush.msra.mxu0 0.0
    %171 = vmatpush.msra.mxu0 0.0
    %172 = vmatpush.msra.mxu0 %v125
    %173 = vmatpush.msra.mxu0 %v124
    %174 = vmatpush.msra.mxu0 %v123
    %175 = vmatpush.msra.mxu0 %v122
    %176 = vmatmul.f32.gmra.mxu0 %v158
    %v177 = vpop.f32.mrf.mxu0
    %v178 = vadd.f32 %v154, %v177
    %179 = vdwg.mxu0
    %v180 = vld [vmem:[#allocation8] sm:$0x1]
    %v182 = vperm.slane %v180, 0
    %v184 = vadd.f32 %v178, %v182
    %v185 = vmax.f32 %v184, 0.0
    %v186 = vld [vmem:[%s7] sm:$0x1]
    %v188 = vperm.slane %v186, 0
    %v190 = vmul.f32 %v185, %v188
    %v191 = vsel %vm156, %v190, 0.0
    %192 = vadd.xlane.f32.xlu0 %v191
    %v193 = vpop.xlane.xlu0 %192
    %s194 = sld [smem:[#allocation2]]
    %v195 = vstv %s194
    %v196 = vadd.f32 %v193, %v195
    %vm197 = vcmask 7168
    %198 = vst.msk [vmem:[%s9] sm:$0xff] %vm197, %v196
    // Predicated region
    $region54: #{critic_forward.1} parent=1 // pred_check
      _
    $region55: #{critic_forward.1} parent=1 // pred_check_branch
      %200 = sbr.rel (0) target = $region57
    $region56: #{critic_forward.1} parent=1 // pred_region
      _
    $region57: #{critic_forward.1} parent=1 // pred_fallthru
      _
    // Predicated region
    $region58: #{critic_forward.1} parent=1 // pred_check
      _
    $region59: #{critic_forward.1} parent=1 // pred_check_branch
      %202 = sbr.rel (0) target = $region61
    $region60: #{critic_forward.1} parent=1 // pred_region
      _
    $region61: #{critic_forward.1} parent=1 // pred_fallthru
      _
    %203 = vsyncpa [#allocation4], 1
    %204 = vsyncpa [#allocation6], 1
    %205 = vsyncpa [#allocation9], 1

</llo_original>
